<compile_context>
chip_gen: v7x
topology: tpu7x:2x2x1
jax: 0.10.0
libtpu: 0.0.40
codegen_flags: <defaults>
</compile_context>

<pallas_src>
import jax
import jax.numpy as jnp
from jax.experimental import pallas as pl
from jax.experimental.pallas import tpu as pltpu

HL = 6          # hidden layer size (hl in the PyTorch script)
IN_DIM = 4
OUT_DIM = 3
LANES = 128


def _mlp_kernel(x_ref, w1_ref, b1_ref, w2_ref, b2_ref, o_ref):
    # x_ref : (IN_DIM, SB, 128)  VMEM  - batch packed over sublanes (SB) and lanes (128)
    # w1_ref: (IN_DIM, HL)       SMEM  - scalar reads -> lane splats
    # b1_ref: (HL,)              SMEM
    # w2_ref: (HL, OUT_DIM)      SMEM
    # b2_ref: (OUT_DIM,)         SMEM
    # o_ref : (OUT_DIM, SB, 128) VMEM

    # Load the 4 input feature slabs, each a dense (SB, 128) block.
    x_rows = [x_ref[k] for k in range(IN_DIM)]

    # fc1 + sigmoid: fully unrolled VPU mul-adds (K = 4), no MXU.
    h = []
    for j in range(HL):
        acc = x_rows[0] * w1_ref[0, j]
        for k in range(1, IN_DIM):
            acc = acc + x_rows[k] * w1_ref[k, j]
        acc = acc + b1_ref[j]
        # sigmoid(x) = 0.5 * (tanh(0.5 x) + 1): single EUP op, exact.
        h.append(0.5 * (jnp.tanh(0.5 * acc) + 1.0))

    # fc2: unrolled VPU mul-adds (K = 6).
    logits = []
    for c in range(OUT_DIM):
        acc = h[0] * w2_ref[0, c]
        for j in range(1, HL):
            acc = acc + h[j] * w2_ref[j, c]
        logits.append(acc + b2_ref[c])

    # Softmax over the class axis. Classes are separate (SB, 128) slabs, so the
    # max / sum over classes is pure element-wise VPU work (no cross-lane reduce).
    m = logits[0]
    for c in range(1, OUT_DIM):
        m = jnp.maximum(m, logits[c])
    e = [jnp.exp(l - m) for l in logits]
    denom = e[0]
    for c in range(1, OUT_DIM):
        denom = denom + e[c]
    inv = 1.0 / denom  # exact divide: rows sum to 1 up to float rounding

    # Lane- and sublane-dense stores into the (OUT_DIM, SB, 128) output tile.
    for c in range(OUT_DIM):
        o_ref[c] = (e[c] * inv).astype(o_ref.dtype)


def net_forward(x, w1, b1, w2, b2, *, tb_max=262144):
    """x: (B, 4) f32; returns (B, 3) f32 softmax probabilities.

    tb_max: max batch elements per grid step (rounded to a multiple of 1024).
    """
    B = x.shape[0]

    # Batch padded to a multiple of the 128-lane width so it can be packed as
    # (n_sublane_blocks, 128).
    Bp = ((B + LANES - 1) // LANES) * LANES
    nsb_total = Bp // LANES  # number of 128-lane rows

    # Per-step sublane-block count: multiple of 8 (so the block satisfies the
    # (8,128) constraint), or the full extent if everything fits in one block.
    sb_cap = max(8, (tb_max // LANES // 8) * 8)
    if nsb_total <= sb_cap:
        sb = nsb_total
        grid_n = 1
    else:
        sb = sb_cap
        grid_n = pl.cdiv(nsb_total, sb)
    nsb_pad = grid_n * sb
    Bp2 = nsb_pad * LANES

    # Feature-major, (sublane, lane)-packed input: (IN_DIM, nsb_pad, 128).
    xt = x.T.astype(jnp.float32)
    if Bp2 != B:
        xt = jnp.pad(xt, ((0, 0), (0, Bp2 - B)))
    xt = xt.reshape(IN_DIM, nsb_pad, LANES)

    out_t = pl.pallas_call(
        _mlp_kernel,
        out_shape=jax.ShapeDtypeStruct((OUT_DIM, nsb_pad, LANES), jnp.float32),
        grid=(grid_n,),
        in_specs=[
            # x: tiled along the sublane-block axis; IN_DIM and lanes are full.
            pl.BlockSpec((IN_DIM, sb, LANES), lambda i: (0, i, 0)),
            # Weights / biases: tiny, SMEM-resident for all grid steps.
            pl.BlockSpec(memory_space=pltpu.MemorySpace.SMEM),
            pl.BlockSpec(memory_space=pltpu.MemorySpace.SMEM),
            pl.BlockSpec(memory_space=pltpu.MemorySpace.SMEM),
            pl.BlockSpec(memory_space=pltpu.MemorySpace.SMEM),
        ],
        out_specs=pl.BlockSpec((OUT_DIM, sb, LANES), lambda i: (0, i, 0)),
        compiler_params=pltpu.CompilerParams(
            dimension_semantics=("parallel",)),
    )(xt, w1, b1, w2, b2)

    # Back to (B, OUT_DIM), dropping batch padding.
    return out_t.reshape(OUT_DIM, Bp2)[:, :B].T


def init_params(key):
    """Deterministic init mimicking nn.Linear's uniform(-1/sqrt(fan_in), ...)."""
    k1, k2, k3, k4 = jax.random.split(key, 4)
    bound1 = 1.0 / jnp.sqrt(IN_DIM)
    bound2 = 1.0 / jnp.sqrt(HL)
    # Stored transposed vs. PyTorch: (in_features, out_features), so math is x @ W + b.
    w1 = jax.random.uniform(k1, (IN_DIM, HL), jnp.float32, -bound1, bound1)
    b1 = jax.random.uniform(k2, (HL,), jnp.float32, -bound1, bound1)
    w2 = jax.random.uniform(k3, (HL, OUT_DIM), jnp.float32, -bound2, bound2)
    b2 = jax.random.uniform(k4, (OUT_DIM,), jnp.float32, -bound2, bound2)
    return w1, b1, w2, b2


def _reference(x, w1, b1, w2, b2):
    h = jax.nn.sigmoid(x @ w1 + b1)
    return jax.nn.softmax(h @ w2 + b2, axis=1)


if __name__ == "__main__":
    key = jax.random.PRNGKey(0)
    kx, kp, kx2 = jax.random.split(key, 3)

    w1, b1, w2, b2 = init_params(kp)

    # Small-batch run (module-sized example): single block, grid = (1,).
    B = 8
    x = jax.random.normal(kx, (B, IN_DIM), jnp.float32)
    out = jax.block_until_ready(net_forward(x, w1, b1, w2, b2))
    ref = _reference(x, w1, b1, w2, b2)
    assert out.shape == (B, OUT_DIM)
    assert jnp.allclose(out, ref, atol=1e-4, rtol=1e-4)
    assert jnp.allclose(jnp.sum(out, axis=1), jnp.ones((B,)), atol=1e-5)

    # Second run with a non-multiple-of-128 batch and a small tile so the
    # padded / multi-block grid path is exercised (nsb_total=20, sb=8, grid=(3,)).
    B2 = 2500
    x2 = jax.random.normal(kx2, (B2, IN_DIM), jnp.float32)
    out2 = jax.block_until_ready(net_forward(x2, w1, b1, w2, b2, tb_max=1024))
    ref2 = _reference(x2, w1, b1, w2, b2)
    assert out2.shape == (B2, OUT_DIM)
    assert jnp.allclose(out2, ref2, atol=1e-4, rtol=1e-4)
    assert jnp.allclose(jnp.sum(out2, axis=1), jnp.ones((B2,)), atol=1e-5)

    print("KERNEL_OK")
</pallas_src>

<mosaic_0001>
module attributes {stable_mosaic.version = 11 : i64} {
  func.func @_mlp_kernel(%arg0: i32, %arg1: memref<4x1x128xf32, #tpu.memory_space<vmem>>, %arg2: memref<4x6xf32, #tpu.memory_space<smem>>, %arg3: memref<6xf32, #tpu.memory_space<smem>>, %arg4: memref<6x3xf32, #tpu.memory_space<smem>>, %arg5: memref<3xf32, #tpu.memory_space<smem>>, %arg6: memref<3x1x128xf32, #tpu.memory_space<vmem>>) attributes {dimension_semantics = [#tpu.dimension_semantics<parallel>], iteration_bounds = array<i64: 1>, scalar_prefetch = 0 : i64, scratch_operands = 0 : i64, tpu.core_type = #tpu.core_type<tc>, window_params = [{transform_indices = @transform_0, window_bounds = array<i64: 4, 1, 128>}, {transform_indices = @transform_1, window_bounds = array<i64: 4, 6>}, {transform_indices = @transform_2, window_bounds = array<i64: 6>}, {transform_indices = @transform_3, window_bounds = array<i64: 6, 3>}, {transform_indices = @transform_4, window_bounds = array<i64: 3>}, {transform_indices = @transform_5, window_bounds = array<i64: 3, 1, 128>}]} {
    %c0 = arith.constant 0 : index
    %c0_0 = arith.constant 0 : index
    %c0_1 = arith.constant 0 : index
    %0 = vector.load %arg1[%c0, %c0_0, %c0_1] : memref<4x1x128xf32, #tpu.memory_space<vmem>>, vector<1x1x128xf32>
    %1 = vector.shape_cast %0 : vector<1x1x128xf32> to vector<1x128xf32>
    %c1 = arith.constant 1 : index
    %c0_2 = arith.constant 0 : index
    %c0_3 = arith.constant 0 : index
    %2 = vector.load %arg1[%c1, %c0_2, %c0_3] : memref<4x1x128xf32, #tpu.memory_space<vmem>>, vector<1x1x128xf32>
    %3 = vector.shape_cast %2 : vector<1x1x128xf32> to vector<1x128xf32>
    %c2 = arith.constant 2 : index
    %c0_4 = arith.constant 0 : index
    %c0_5 = arith.constant 0 : index
    %4 = vector.load %arg1[%c2, %c0_4, %c0_5] : memref<4x1x128xf32, #tpu.memory_space<vmem>>, vector<1x1x128xf32>
    %5 = vector.shape_cast %4 : vector<1x1x128xf32> to vector<1x128xf32>
    %c3 = arith.constant 3 : index
    %c0_6 = arith.constant 0 : index
    %c0_7 = arith.constant 0 : index
    %6 = vector.load %arg1[%c3, %c0_6, %c0_7] : memref<4x1x128xf32, #tpu.memory_space<vmem>>, vector<1x1x128xf32>
    %7 = vector.shape_cast %6 : vector<1x1x128xf32> to vector<1x128xf32>
    %c0_8 = arith.constant 0 : index
    %c0_9 = arith.constant 0 : index
    %8 = memref.load %arg2[%c0_8, %c0_9] : memref<4x6xf32, #tpu.memory_space<smem>>
    %9 = vector.broadcast %8 : f32 to vector<1x128xf32>
    %10 = arith.mulf %1, %9 : vector<1x128xf32>
    %c1_10 = arith.constant 1 : index
    %c0_11 = arith.constant 0 : index
    %11 = memref.load %arg2[%c1_10, %c0_11] : memref<4x6xf32, #tpu.memory_space<smem>>
    %12 = vector.broadcast %11 : f32 to vector<1x128xf32>
    %13 = arith.mulf %3, %12 : vector<1x128xf32>
    %14 = arith.addf %10, %13 : vector<1x128xf32>
    %c2_12 = arith.constant 2 : index
    %c0_13 = arith.constant 0 : index
    %15 = memref.load %arg2[%c2_12, %c0_13] : memref<4x6xf32, #tpu.memory_space<smem>>
    %16 = vector.broadcast %15 : f32 to vector<1x128xf32>
    %17 = arith.mulf %5, %16 : vector<1x128xf32>
    %18 = arith.addf %14, %17 : vector<1x128xf32>
    %c3_14 = arith.constant 3 : index
    %c0_15 = arith.constant 0 : index
    %19 = memref.load %arg2[%c3_14, %c0_15] : memref<4x6xf32, #tpu.memory_space<smem>>
    %20 = vector.broadcast %19 : f32 to vector<1x128xf32>
    %21 = arith.mulf %7, %20 : vector<1x128xf32>
    %22 = arith.addf %18, %21 : vector<1x128xf32>
    %c0_16 = arith.constant 0 : index
    %23 = memref.load %arg3[%c0_16] : memref<6xf32, #tpu.memory_space<smem>>
    %24 = vector.broadcast %23 : f32 to vector<1x128xf32>
    %25 = arith.addf %22, %24 : vector<1x128xf32>
    %cst = arith.constant 5.000000e-01 : f32
    %26 = vector.broadcast %cst : f32 to vector<1x128xf32>
    %27 = arith.mulf %26, %25 : vector<1x128xf32>
    %28 = math.tanh %27 : vector<1x128xf32>
    %cst_17 = arith.constant 1.000000e+00 : f32
    %29 = vector.broadcast %cst_17 : f32 to vector<1x128xf32>
    %30 = arith.addf %28, %29 : vector<1x128xf32>
    %cst_18 = arith.constant 5.000000e-01 : f32
    %31 = vector.broadcast %cst_18 : f32 to vector<1x128xf32>
    %32 = arith.mulf %31, %30 : vector<1x128xf32>
    %c0_19 = arith.constant 0 : index
    %c1_20 = arith.constant 1 : index
    %33 = memref.load %arg2[%c0_19, %c1_20] : memref<4x6xf32, #tpu.memory_space<smem>>
    %34 = vector.broadcast %33 : f32 to vector<1x128xf32>
    %35 = arith.mulf %1, %34 : vector<1x128xf32>
    %c1_21 = arith.constant 1 : index
    %c1_22 = arith.constant 1 : index
    %36 = memref.load %arg2[%c1_21, %c1_22] : memref<4x6xf32, #tpu.memory_space<smem>>
    %37 = vector.broadcast %36 : f32 to vector<1x128xf32>
    %38 = arith.mulf %3, %37 : vector<1x128xf32>
    %39 = arith.addf %35, %38 : vector<1x128xf32>
    %c2_23 = arith.constant 2 : index
    %c1_24 = arith.constant 1 : index
    %40 = memref.load %arg2[%c2_23, %c1_24] : memref<4x6xf32, #tpu.memory_space<smem>>
    %41 = vector.broadcast %40 : f32 to vector<1x128xf32>
    %42 = arith.mulf %5, %41 : vector<1x128xf32>
    %43 = arith.addf %39, %42 : vector<1x128xf32>
    %c3_25 = arith.constant 3 : index
    %c1_26 = arith.constant 1 : index
    %44 = memref.load %arg2[%c3_25, %c1_26] : memref<4x6xf32, #tpu.memory_space<smem>>
    %45 = vector.broadcast %44 : f32 to vector<1x128xf32>
    %46 = arith.mulf %7, %45 : vector<1x128xf32>
    %47 = arith.addf %43, %46 : vector<1x128xf32>
    %c1_27 = arith.constant 1 : index
    %48 = memref.load %arg3[%c1_27] : memref<6xf32, #tpu.memory_space<smem>>
    %49 = vector.broadcast %48 : f32 to vector<1x128xf32>
    %50 = arith.addf %47, %49 : vector<1x128xf32>
    %cst_28 = arith.constant 5.000000e-01 : f32
    %51 = vector.broadcast %cst_28 : f32 to vector<1x128xf32>
    %52 = arith.mulf %51, %50 : vector<1x128xf32>
    %53 = math.tanh %52 : vector<1x128xf32>
    %cst_29 = arith.constant 1.000000e+00 : f32
    %54 = vector.broadcast %cst_29 : f32 to vector<1x128xf32>
    %55 = arith.addf %53, %54 : vector<1x128xf32>
    %cst_30 = arith.constant 5.000000e-01 : f32
    %56 = vector.broadcast %cst_30 : f32 to vector<1x128xf32>
    %57 = arith.mulf %56, %55 : vector<1x128xf32>
    %c0_31 = arith.constant 0 : index
    %c2_32 = arith.constant 2 : index
    %58 = memref.load %arg2[%c0_31, %c2_32] : memref<4x6xf32, #tpu.memory_space<smem>>
    %59 = vector.broadcast %58 : f32 to vector<1x128xf32>
    %60 = arith.mulf %1, %59 : vector<1x128xf32>
    %c1_33 = arith.constant 1 : index
    %c2_34 = arith.constant 2 : index
    %61 = memref.load %arg2[%c1_33, %c2_34] : memref<4x6xf32, #tpu.memory_space<smem>>
    %62 = vector.broadcast %61 : f32 to vector<1x128xf32>
    %63 = arith.mulf %3, %62 : vector<1x128xf32>
    %64 = arith.addf %60, %63 : vector<1x128xf32>
    %c2_35 = arith.constant 2 : index
    %c2_36 = arith.constant 2 : index
    %65 = memref.load %arg2[%c2_35, %c2_36] : memref<4x6xf32, #tpu.memory_space<smem>>
    %66 = vector.broadcast %65 : f32 to vector<1x128xf32>
    %67 = arith.mulf %5, %66 : vector<1x128xf32>
    %68 = arith.addf %64, %67 : vector<1x128xf32>
    %c3_37 = arith.constant 3 : index
    %c2_38 = arith.constant 2 : index
    %69 = memref.load %arg2[%c3_37, %c2_38] : memref<4x6xf32, #tpu.memory_space<smem>>
    %70 = vector.broadcast %69 : f32 to vector<1x128xf32>
    %71 = arith.mulf %7, %70 : vector<1x128xf32>
    %72 = arith.addf %68, %71 : vector<1x128xf32>
    %c2_39 = arith.constant 2 : index
    %73 = memref.load %arg3[%c2_39] : memref<6xf32, #tpu.memory_space<smem>>
    %74 = vector.broadcast %73 : f32 to vector<1x128xf32>
    %75 = arith.addf %72, %74 : vector<1x128xf32>
    %cst_40 = arith.constant 5.000000e-01 : f32
    %76 = vector.broadcast %cst_40 : f32 to vector<1x128xf32>
    %77 = arith.mulf %76, %75 : vector<1x128xf32>
    %78 = math.tanh %77 : vector<1x128xf32>
    %cst_41 = arith.constant 1.000000e+00 : f32
    %79 = vector.broadcast %cst_41 : f32 to vector<1x128xf32>
    %80 = arith.addf %78, %79 : vector<1x128xf32>
    %cst_42 = arith.constant 5.000000e-01 : f32
    %81 = vector.broadcast %cst_42 : f32 to vector<1x128xf32>
    %82 = arith.mulf %81, %80 : vector<1x128xf32>
    %c0_43 = arith.constant 0 : index
    %c3_44 = arith.constant 3 : index
    %83 = memref.load %arg2[%c0_43, %c3_44] : memref<4x6xf32, #tpu.memory_space<smem>>
    %84 = vector.broadcast %83 : f32 to vector<1x128xf32>
    %85 = arith.mulf %1, %84 : vector<1x128xf32>
    %c1_45 = arith.constant 1 : index
    %c3_46 = arith.constant 3 : index
    %86 = memref.load %arg2[%c1_45, %c3_46] : memref<4x6xf32, #tpu.memory_space<smem>>
    %87 = vector.broadcast %86 : f32 to vector<1x128xf32>
    %88 = arith.mulf %3, %87 : vector<1x128xf32>
    %89 = arith.addf %85, %88 : vector<1x128xf32>
    %c2_47 = arith.constant 2 : index
    %c3_48 = arith.constant 3 : index
    %90 = memref.load %arg2[%c2_47, %c3_48] : memref<4x6xf32, #tpu.memory_space<smem>>
    %91 = vector.broadcast %90 : f32 to vector<1x128xf32>
    %92 = arith.mulf %5, %91 : vector<1x128xf32>
    %93 = arith.addf %89, %92 : vector<1x128xf32>
    %c3_49 = arith.constant 3 : index
    %c3_50 = arith.constant 3 : index
    %94 = memref.load %arg2[%c3_49, %c3_50] : memref<4x6xf32, #tpu.memory_space<smem>>
    %95 = vector.broadcast %94 : f32 to vector<1x128xf32>
    %96 = arith.mulf %7, %95 : vector<1x128xf32>
    %97 = arith.addf %93, %96 : vector<1x128xf32>
    %c3_51 = arith.constant 3 : index
    %98 = memref.load %arg3[%c3_51] : memref<6xf32, #tpu.memory_space<smem>>
    %99 = vector.broadcast %98 : f32 to vector<1x128xf32>
    %100 = arith.addf %97, %99 : vector<1x128xf32>
    %cst_52 = arith.constant 5.000000e-01 : f32
    %101 = vector.broadcast %cst_52 : f32 to vector<1x128xf32>
    %102 = arith.mulf %101, %100 : vector<1x128xf32>
    %103 = math.tanh %102 : vector<1x128xf32>
    %cst_53 = arith.constant 1.000000e+00 : f32
    %104 = vector.broadcast %cst_53 : f32 to vector<1x128xf32>
    %105 = arith.addf %103, %104 : vector<1x128xf32>
    %cst_54 = arith.constant 5.000000e-01 : f32
    %106 = vector.broadcast %cst_54 : f32 to vector<1x128xf32>
    %107 = arith.mulf %106, %105 : vector<1x128xf32>
    %c0_55 = arith.constant 0 : index
    %c4 = arith.constant 4 : index
    %108 = memref.load %arg2[%c0_55, %c4] : memref<4x6xf32, #tpu.memory_space<smem>>
    %109 = vector.broadcast %108 : f32 to vector<1x128xf32>
    %110 = arith.mulf %1, %109 : vector<1x128xf32>
    %c1_56 = arith.constant 1 : index
    %c4_57 = arith.constant 4 : index
    %111 = memref.load %arg2[%c1_56, %c4_57] : memref<4x6xf32, #tpu.memory_space<smem>>
    %112 = vector.broadcast %111 : f32 to vector<1x128xf32>
    %113 = arith.mulf %3, %112 : vector<1x128xf32>
    %114 = arith.addf %110, %113 : vector<1x128xf32>
    %c2_58 = arith.constant 2 : index
    %c4_59 = arith.constant 4 : index
    %115 = memref.load %arg2[%c2_58, %c4_59] : memref<4x6xf32, #tpu.memory_space<smem>>
    %116 = vector.broadcast %115 : f32 to vector<1x128xf32>
    %117 = arith.mulf %5, %116 : vector<1x128xf32>
    %118 = arith.addf %114, %117 : vector<1x128xf32>
    %c3_60 = arith.constant 3 : index
    %c4_61 = arith.constant 4 : index
    %119 = memref.load %arg2[%c3_60, %c4_61] : memref<4x6xf32, #tpu.memory_space<smem>>
    %120 = vector.broadcast %119 : f32 to vector<1x128xf32>
    %121 = arith.mulf %7, %120 : vector<1x128xf32>
    %122 = arith.addf %118, %121 : vector<1x128xf32>
    %c4_62 = arith.constant 4 : index
    %123 = memref.load %arg3[%c4_62] : memref<6xf32, #tpu.memory_space<smem>>
    %124 = vector.broadcast %123 : f32 to vector<1x128xf32>
    %125 = arith.addf %122, %124 : vector<1x128xf32>
    %cst_63 = arith.constant 5.000000e-01 : f32
    %126 = vector.broadcast %cst_63 : f32 to vector<1x128xf32>
    %127 = arith.mulf %126, %125 : vector<1x128xf32>
    %128 = math.tanh %127 : vector<1x128xf32>
    %cst_64 = arith.constant 1.000000e+00 : f32
    %129 = vector.broadcast %cst_64 : f32 to vector<1x128xf32>
    %130 = arith.addf %128, %129 : vector<1x128xf32>
    %cst_65 = arith.constant 5.000000e-01 : f32
    %131 = vector.broadcast %cst_65 : f32 to vector<1x128xf32>
    %132 = arith.mulf %131, %130 : vector<1x128xf32>
    %c0_66 = arith.constant 0 : index
    %c5 = arith.constant 5 : index
    %133 = memref.load %arg2[%c0_66, %c5] : memref<4x6xf32, #tpu.memory_space<smem>>
    %134 = vector.broadcast %133 : f32 to vector<1x128xf32>
    %135 = arith.mulf %1, %134 : vector<1x128xf32>
    %c1_67 = arith.constant 1 : index
    %c5_68 = arith.constant 5 : index
    %136 = memref.load %arg2[%c1_67, %c5_68] : memref<4x6xf32, #tpu.memory_space<smem>>
    %137 = vector.broadcast %136 : f32 to vector<1x128xf32>
    %138 = arith.mulf %3, %137 : vector<1x128xf32>
    %139 = arith.addf %135, %138 : vector<1x128xf32>
    %c2_69 = arith.constant 2 : index
    %c5_70 = arith.constant 5 : index
    %140 = memref.load %arg2[%c2_69, %c5_70] : memref<4x6xf32, #tpu.memory_space<smem>>
    %141 = vector.broadcast %140 : f32 to vector<1x128xf32>
    %142 = arith.mulf %5, %141 : vector<1x128xf32>
    %143 = arith.addf %139, %142 : vector<1x128xf32>
    %c3_71 = arith.constant 3 : index
    %c5_72 = arith.constant 5 : index
    %144 = memref.load %arg2[%c3_71, %c5_72] : memref<4x6xf32, #tpu.memory_space<smem>>
    %145 = vector.broadcast %144 : f32 to vector<1x128xf32>
    %146 = arith.mulf %7, %145 : vector<1x128xf32>
    %147 = arith.addf %143, %146 : vector<1x128xf32>
    %c5_73 = arith.constant 5 : index
    %148 = memref.load %arg3[%c5_73] : memref<6xf32, #tpu.memory_space<smem>>
    %149 = vector.broadcast %148 : f32 to vector<1x128xf32>
    %150 = arith.addf %147, %149 : vector<1x128xf32>
    %cst_74 = arith.constant 5.000000e-01 : f32
    %151 = vector.broadcast %cst_74 : f32 to vector<1x128xf32>
    %152 = arith.mulf %151, %150 : vector<1x128xf32>
    %153 = math.tanh %152 : vector<1x128xf32>
    %cst_75 = arith.constant 1.000000e+00 : f32
    %154 = vector.broadcast %cst_75 : f32 to vector<1x128xf32>
    %155 = arith.addf %153, %154 : vector<1x128xf32>
    %cst_76 = arith.constant 5.000000e-01 : f32
    %156 = vector.broadcast %cst_76 : f32 to vector<1x128xf32>
    %157 = arith.mulf %156, %155 : vector<1x128xf32>
    %c0_77 = arith.constant 0 : index
    %c0_78 = arith.constant 0 : index
    %158 = memref.load %arg4[%c0_77, %c0_78] : memref<6x3xf32, #tpu.memory_space<smem>>
    %159 = vector.broadcast %158 : f32 to vector<1x128xf32>
    %160 = arith.mulf %32, %159 : vector<1x128xf32>
    %c1_79 = arith.constant 1 : index
    %c0_80 = arith.constant 0 : index
    %161 = memref.load %arg4[%c1_79, %c0_80] : memref<6x3xf32, #tpu.memory_space<smem>>
    %162 = vector.broadcast %161 : f32 to vector<1x128xf32>
    %163 = arith.mulf %57, %162 : vector<1x128xf32>
    %164 = arith.addf %160, %163 : vector<1x128xf32>
    %c2_81 = arith.constant 2 : index
    %c0_82 = arith.constant 0 : index
    %165 = memref.load %arg4[%c2_81, %c0_82] : memref<6x3xf32, #tpu.memory_space<smem>>
    %166 = vector.broadcast %165 : f32 to vector<1x128xf32>
    %167 = arith.mulf %82, %166 : vector<1x128xf32>
    %168 = arith.addf %164, %167 : vector<1x128xf32>
    %c3_83 = arith.constant 3 : index
    %c0_84 = arith.constant 0 : index
    %169 = memref.load %arg4[%c3_83, %c0_84] : memref<6x3xf32, #tpu.memory_space<smem>>
    %170 = vector.broadcast %169 : f32 to vector<1x128xf32>
    %171 = arith.mulf %107, %170 : vector<1x128xf32>
    %172 = arith.addf %168, %171 : vector<1x128xf32>
    %c4_85 = arith.constant 4 : index
    %c0_86 = arith.constant 0 : index
    %173 = memref.load %arg4[%c4_85, %c0_86] : memref<6x3xf32, #tpu.memory_space<smem>>
    %174 = vector.broadcast %173 : f32 to vector<1x128xf32>
    %175 = arith.mulf %132, %174 : vector<1x128xf32>
    %176 = arith.addf %172, %175 : vector<1x128xf32>
    %c5_87 = arith.constant 5 : index
    %c0_88 = arith.constant 0 : index
    %177 = memref.load %arg4[%c5_87, %c0_88] : memref<6x3xf32, #tpu.memory_space<smem>>
    %178 = vector.broadcast %177 : f32 to vector<1x128xf32>
    %179 = arith.mulf %157, %178 : vector<1x128xf32>
    %180 = arith.addf %176, %179 : vector<1x128xf32>
    %c0_89 = arith.constant 0 : index
    %181 = memref.load %arg5[%c0_89] : memref<3xf32, #tpu.memory_space<smem>>
    %182 = vector.broadcast %181 : f32 to vector<1x128xf32>
    %183 = arith.addf %180, %182 : vector<1x128xf32>
    %c0_90 = arith.constant 0 : index
    %c1_91 = arith.constant 1 : index
    %184 = memref.load %arg4[%c0_90, %c1_91] : memref<6x3xf32, #tpu.memory_space<smem>>
    %185 = vector.broadcast %184 : f32 to vector<1x128xf32>
    %186 = arith.mulf %32, %185 : vector<1x128xf32>
    %c1_92 = arith.constant 1 : index
    %c1_93 = arith.constant 1 : index
    %187 = memref.load %arg4[%c1_92, %c1_93] : memref<6x3xf32, #tpu.memory_space<smem>>
    %188 = vector.broadcast %187 : f32 to vector<1x128xf32>
    %189 = arith.mulf %57, %188 : vector<1x128xf32>
    %190 = arith.addf %186, %189 : vector<1x128xf32>
    %c2_94 = arith.constant 2 : index
    %c1_95 = arith.constant 1 : index
    %191 = memref.load %arg4[%c2_94, %c1_95] : memref<6x3xf32, #tpu.memory_space<smem>>
    %192 = vector.broadcast %191 : f32 to vector<1x128xf32>
    %193 = arith.mulf %82, %192 : vector<1x128xf32>
    %194 = arith.addf %190, %193 : vector<1x128xf32>
    %c3_96 = arith.constant 3 : index
    %c1_97 = arith.constant 1 : index
    %195 = memref.load %arg4[%c3_96, %c1_97] : memref<6x3xf32, #tpu.memory_space<smem>>
    %196 = vector.broadcast %195 : f32 to vector<1x128xf32>
    %197 = arith.mulf %107, %196 : vector<1x128xf32>
    %198 = arith.addf %194, %197 : vector<1x128xf32>
    %c4_98 = arith.constant 4 : index
    %c1_99 = arith.constant 1 : index
    %199 = memref.load %arg4[%c4_98, %c1_99] : memref<6x3xf32, #tpu.memory_space<smem>>
    %200 = vector.broadcast %199 : f32 to vector<1x128xf32>
    %201 = arith.mulf %132, %200 : vector<1x128xf32>
    %202 = arith.addf %198, %201 : vector<1x128xf32>
    %c5_100 = arith.constant 5 : index
    %c1_101 = arith.constant 1 : index
    %203 = memref.load %arg4[%c5_100, %c1_101] : memref<6x3xf32, #tpu.memory_space<smem>>
    %204 = vector.broadcast %203 : f32 to vector<1x128xf32>
    %205 = arith.mulf %157, %204 : vector<1x128xf32>
    %206 = arith.addf %202, %205 : vector<1x128xf32>
    %c1_102 = arith.constant 1 : index
    %207 = memref.load %arg5[%c1_102] : memref<3xf32, #tpu.memory_space<smem>>
    %208 = vector.broadcast %207 : f32 to vector<1x128xf32>
    %209 = arith.addf %206, %208 : vector<1x128xf32>
    %c0_103 = arith.constant 0 : index
    %c2_104 = arith.constant 2 : index
    %210 = memref.load %arg4[%c0_103, %c2_104] : memref<6x3xf32, #tpu.memory_space<smem>>
    %211 = vector.broadcast %210 : f32 to vector<1x128xf32>
    %212 = arith.mulf %32, %211 : vector<1x128xf32>
    %c1_105 = arith.constant 1 : index
    %c2_106 = arith.constant 2 : index
    %213 = memref.load %arg4[%c1_105, %c2_106] : memref<6x3xf32, #tpu.memory_space<smem>>
    %214 = vector.broadcast %213 : f32 to vector<1x128xf32>
    %215 = arith.mulf %57, %214 : vector<1x128xf32>
    %216 = arith.addf %212, %215 : vector<1x128xf32>
    %c2_107 = arith.constant 2 : index
    %c2_108 = arith.constant 2 : index
    %217 = memref.load %arg4[%c2_107, %c2_108] : memref<6x3xf32, #tpu.memory_space<smem>>
    %218 = vector.broadcast %217 : f32 to vector<1x128xf32>
    %219 = arith.mulf %82, %218 : vector<1x128xf32>
    %220 = arith.addf %216, %219 : vector<1x128xf32>
    %c3_109 = arith.constant 3 : index
    %c2_110 = arith.constant 2 : index
    %221 = memref.load %arg4[%c3_109, %c2_110] : memref<6x3xf32, #tpu.memory_space<smem>>
    %222 = vector.broadcast %221 : f32 to vector<1x128xf32>
    %223 = arith.mulf %107, %222 : vector<1x128xf32>
    %224 = arith.addf %220, %223 : vector<1x128xf32>
    %c4_111 = arith.constant 4 : index
    %c2_112 = arith.constant 2 : index
    %225 = memref.load %arg4[%c4_111, %c2_112] : memref<6x3xf32, #tpu.memory_space<smem>>
    %226 = vector.broadcast %225 : f32 to vector<1x128xf32>
    %227 = arith.mulf %132, %226 : vector<1x128xf32>
    %228 = arith.addf %224, %227 : vector<1x128xf32>
    %c5_113 = arith.constant 5 : index
    %c2_114 = arith.constant 2 : index
    %229 = memref.load %arg4[%c5_113, %c2_114] : memref<6x3xf32, #tpu.memory_space<smem>>
    %230 = vector.broadcast %229 : f32 to vector<1x128xf32>
    %231 = arith.mulf %157, %230 : vector<1x128xf32>
    %232 = arith.addf %228, %231 : vector<1x128xf32>
    %c2_115 = arith.constant 2 : index
    %233 = memref.load %arg5[%c2_115] : memref<3xf32, #tpu.memory_space<smem>>
    %234 = vector.broadcast %233 : f32 to vector<1x128xf32>
    %235 = arith.addf %232, %234 : vector<1x128xf32>
    %236 = arith.maximumf %183, %209 : vector<1x128xf32>
    %237 = arith.maximumf %236, %235 : vector<1x128xf32>
    %238 = arith.subf %183, %237 : vector<1x128xf32>
    %239 = math.exp %238 : vector<1x128xf32>
    %240 = arith.subf %209, %237 : vector<1x128xf32>
    %241 = math.exp %240 : vector<1x128xf32>
    %242 = arith.subf %235, %237 : vector<1x128xf32>
    %243 = math.exp %242 : vector<1x128xf32>
    %244 = arith.addf %239, %241 : vector<1x128xf32>
    %245 = arith.addf %244, %243 : vector<1x128xf32>
    %cst_116 = arith.constant 1.000000e+00 : f32
    %246 = vector.broadcast %cst_116 : f32 to vector<1x128xf32>
    %247 = arith.divf %246, %245 : vector<1x128xf32>
    %248 = arith.mulf %239, %247 : vector<1x128xf32>
    %c0_117 = arith.constant 0 : index
    %c0_118 = arith.constant 0 : index
    %c0_119 = arith.constant 0 : index
    %249 = vector.load %arg6[%c0_117, %c0_118, %c0_119] : memref<3x1x128xf32, #tpu.memory_space<vmem>>, vector<1x1x128xf32>
    %250 = vector.shape_cast %249 : vector<1x1x128xf32> to vector<1x128xf32>
    %251 = vector.shape_cast %248 : vector<1x128xf32> to vector<1x1x128xf32>
    tpu.vector_store %arg6[%c0_117, %c0_118, %c0_119], %251 {strides = array<i32>} : memref<3x1x128xf32, #tpu.memory_space<vmem>>, vector<1x1x128xf32>,
    %252 = arith.mulf %241, %247 : vector<1x128xf32>
    %c1_120 = arith.constant 1 : index
    %c0_121 = arith.constant 0 : index
    %c0_122 = arith.constant 0 : index
    %253 = vector.load %arg6[%c1_120, %c0_121, %c0_122] : memref<3x1x128xf32, #tpu.memory_space<vmem>>, vector<1x1x128xf32>
    %254 = vector.shape_cast %253 : vector<1x1x128xf32> to vector<1x128xf32>
    %255 = vector.shape_cast %252 : vector<1x128xf32> to vector<1x1x128xf32>
    tpu.vector_store %arg6[%c1_120, %c0_121, %c0_122], %255 {strides = array<i32>} : memref<3x1x128xf32, #tpu.memory_space<vmem>>, vector<1x1x128xf32>,
    %256 = arith.mulf %243, %247 : vector<1x128xf32>
    %c2_123 = arith.constant 2 : index
    %c0_124 = arith.constant 0 : index
    %c0_125 = arith.constant 0 : index
    %257 = vector.load %arg6[%c2_123, %c0_124, %c0_125] : memref<3x1x128xf32, #tpu.memory_space<vmem>>, vector<1x1x128xf32>
    %258 = vector.shape_cast %257 : vector<1x1x128xf32> to vector<1x128xf32>
    %259 = vector.shape_cast %256 : vector<1x128xf32> to vector<1x1x128xf32>
    tpu.vector_store %arg6[%c2_123, %c0_124, %c0_125], %259 {strides = array<i32>} : memref<3x1x128xf32, #tpu.memory_space<vmem>>, vector<1x1x128xf32>,
    return
  }
  func.func @transform_0(%arg0: i32) -> (i32, i32, i32) {
    %c0_i32 = arith.constant 0 : i32
    %c0_i32_0 = arith.constant 0 : i32
    %c0_i32_1 = arith.constant 0 : i32
    return %c0_i32, %arg0, %c0_i32_0 : i32, i32, i32
  }
  func.func @transform_1(%arg0: i32) -> (i32, i32) {
    %c0_i32 = arith.constant 0 : i32
    %c0_i32_0 = arith.constant 0 : i32
    %c0_i32_1 = arith.constant 0 : i32
    return %c0_i32, %c0_i32_0 : i32, i32
  }
  func.func @transform_2(%arg0: i32) -> i32 {
    %c0_i32 = arith.constant 0 : i32
    %c0_i32_0 = arith.constant 0 : i32
    return %c0_i32 : i32
  }
  func.func @transform_3(%arg0: i32) -> (i32, i32) {
    %c0_i32 = arith.constant 0 : i32
    %c0_i32_0 = arith.constant 0 : i32
    %c0_i32_1 = arith.constant 0 : i32
    return %c0_i32, %c0_i32_0 : i32, i32
  }
  func.func @transform_4(%arg0: i32) -> i32 {
    %c0_i32 = arith.constant 0 : i32
    %c0_i32_0 = arith.constant 0 : i32
    return %c0_i32 : i32
  }
  func.func @transform_5(%arg0: i32) -> (i32, i32, i32) {
    %c0_i32 = arith.constant 0 : i32
    %c0_i32_0 = arith.constant 0 : i32
    %c0_i32_1 = arith.constant 0 : i32
    return %c0_i32, %arg0, %c0_i32_0 : i32, i32, i32
  }
}

</mosaic_0001>

<llo_original>
// kernel: tpu_custom_call.1
$region0: #{tpu_custom_call.1}
  #allocation0 [shape = 'u32[]', space=smem, size = 0x4, offset = 0x4, fixed_abs, tag = 'smem constant byte address 0x4 - core index']
  #allocation1 [shape = 'u32[144,128]{1,0:T(1,128)}', space=vmem, size = 0x12000, scoped, tag = 'internal scratch']
  %s0 = inlined_call_operand.vmem [shape: f32[4,1,128], index: 0, kind: input, shape index: {}]
  %s1 = inlined_call_operand.vmem [shape: f32[4,6], index: 1, kind: input, shape index: {}]
  %s2 = inlined_call_operand.vmem [shape: f32[6], index: 2, kind: input, shape index: {}]
  %s3 = inlined_call_operand.vmem [shape: f32[6,3], index: 3, kind: input, shape index: {}]
  %s4 = inlined_call_operand.vmem [shape: f32[3], index: 4, kind: input, shape index: {}]
  %s5 = inlined_call_operand.hbm [shape: f32[3,1,128], index: 5, kind: output, shape index: {}]
  %s6 = sld [smem:[#allocation0]]
  $region46: #{tpu_custom_call.1} parent=0
    _
  %s8 = ssub.s32 1, %s6
  %s9 = scalar_select 0, %s8, %s6
  $region1: #{tpu_custom_call.1} parent=0
    #allocation2 [shape = 'u8[2048]{0}', space=smem, size = 0x800, scoped, tag = 'input window, operand 1, single buffered']
    #allocation3 [shape = 's32[1]{0}', space=sflag, size = 0x4, scoped, tag = 'scoped memory for tpu_custom_call.1']
    #allocation4 [shape = 's32[1]{0}', space=sflag, size = 0x4, scoped, tag = 'scoped memory for tpu_custom_call.1']
    #allocation5 [shape = 'u8[512]{0}', space=smem, size = 0x200, scoped, tag = 'input window, operand 2, single buffered']
    #allocation6 [shape = 's32[1]{0}', space=sflag, size = 0x4, scoped, tag = 'scoped memory for tpu_custom_call.1']
    #allocation7 [shape = 'u8[4096]{0}', space=smem, size = 0x1000, scoped, tag = 'input window, operand 3, single buffered']
    #allocation8 [shape = 'u8[512]{0}', space=smem, size = 0x200, scoped, tag = 'input window, operand 4, single buffered']
    #allocation9 [shape = 's32[1]{0}', space=sflag, size = 0x4, scoped, tag = 'scoped memory for tpu_custom_call.1']
    #allocation10 [shape = 'u8[1536]{0}', space=vmem, size = 0x800, scoped, tag = 'output window, operand 0, single buffered']
    %10 = vsyncpa [#allocation4], 0
    %11 = vsyncpa [#allocation6], 0
    %12 = vsyncpa [#allocation9], 0
    %13 = vsyncpa [#allocation3], 0
    // Predicated region
    $region2: #{tpu_custom_call.1} parent=1 // pred_check
      _
    $region3: #{tpu_custom_call.1} parent=1 // pred_check_branch
      %15 = sbr.rel (0) target = $region5
    $region4: #{tpu_custom_call.1} parent=1 // pred_region
      _
    $region5: #{tpu_custom_call.1} parent=1 // pred_fallthru
      _
    // Predicated region
    $region6: #{tpu_custom_call.1} parent=1 // pred_check
      _
    $region7: #{tpu_custom_call.1} parent=1 // pred_check_branch
      %17 = sbr.rel (0) target = $region9
    $region8: #{tpu_custom_call.1} parent=1 // pred_region
      %s19 = ssub.s32 64, 64
      %20 = vsyncadd [#allocation4], %s19
      %s22 = sshll.u32 %s1, 4
      %s23 = int_to_ptr.vmem [resolvable:$true] %s22
      %25 = dma.vmem_to_smem %s23, 64, [#allocation2], [#allocation4]
    $region9: #{tpu_custom_call.1} parent=1 // pred_fallthru
      _
    // Predicated region
    $region10: #{tpu_custom_call.1} parent=1 // pred_check
      _
    $region11: #{tpu_custom_call.1} parent=1 // pred_check_branch
      %27 = sbr.rel (0) target = $region13
    $region12: #{tpu_custom_call.1} parent=1 // pred_region
      %s29 = ssub.s32 16, 16
      %30 = vsyncadd [#allocation6], %s29
      %s32 = sshll.u32 %s2, 4
      %s33 = int_to_ptr.vmem [resolvable:$true] %s32
      %35 = dma.vmem_to_smem %s33, 16, [#allocation5], [#allocation6]
    $region13: #{tpu_custom_call.1} parent=1 // pred_fallthru
      _
    // Predicated region
    $region14: #{tpu_custom_call.1} parent=1 // pred_check
      _
    $region15: #{tpu_custom_call.1} parent=1 // pred_check_branch
      %37 = sbr.rel (0) target = $region17
    $region16: #{tpu_custom_call.1} parent=1 // pred_region
      %s39 = ssub.s32 128, 128
      %40 = vsyncadd [#allocation6], %s39
      %s42 = sshll.u32 %s3, 4
      %s43 = int_to_ptr.vmem [resolvable:$true] %s42
      %45 = dma.vmem_to_smem %s43, 128, [#allocation7], [#allocation6]
    $region17: #{tpu_custom_call.1} parent=1 // pred_fallthru
      _
    // Predicated region
    $region18: #{tpu_custom_call.1} parent=1 // pred_check
      _
    $region19: #{tpu_custom_call.1} parent=1 // pred_check_branch
      %47 = sbr.rel (0) target = $region21
    $region20: #{tpu_custom_call.1} parent=1 // pred_region
      %s49 = ssub.s32 16, 16
      %50 = vsyncadd [#allocation9], %s49
      %s52 = sshll.u32 %s4, 4
      %s53 = int_to_ptr.vmem [resolvable:$true] %s52
      %55 = dma.vmem_to_smem %s53, 16, [#allocation8], [#allocation9]
    $region21: #{tpu_custom_call.1} parent=1 // pred_fallthru
      _
    // Predicated region
    $region22: #{tpu_custom_call.1} parent=1 // pred_check
      _
    $region23: #{tpu_custom_call.1} parent=1 // pred_check_branch
      %57 = sbr.rel (0) target = $region25
    $region24: #{tpu_custom_call.1} parent=1 // pred_region
      %58 = dma.done [#allocation4], 64
    $region25: #{tpu_custom_call.1} parent=1 // pred_fallthru
      _
    // Predicated region
    $region26: #{tpu_custom_call.1} parent=1 // pred_check
      _
    $region27: #{tpu_custom_call.1} parent=1 // pred_check_branch
      %60 = sbr.rel (0) target = $region29
    $region28: #{tpu_custom_call.1} parent=1 // pred_region
      %61 = dma.done [#allocation6], 16
    $region29: #{tpu_custom_call.1} parent=1 // pred_fallthru
      _
    // Predicated region
    $region30: #{tpu_custom_call.1} parent=1 // pred_check
      _
    $region31: #{tpu_custom_call.1} parent=1 // pred_check_branch
      %63 = sbr.rel (0) target = $region33
    $region32: #{tpu_custom_call.1} parent=1 // pred_region
      %64 = dma.done [#allocation6], 128
    $region33: #{tpu_custom_call.1} parent=1 // pred_fallthru
      _
    // Predicated region
    $region34: #{tpu_custom_call.1} parent=1 // pred_check
      _
    $region35: #{tpu_custom_call.1} parent=1 // pred_check_branch
      %66 = sbr.rel (0) target = $region37
    $region36: #{tpu_custom_call.1} parent=1 // pred_region
      %67 = dma.done [#allocation9], 16
    $region37: #{tpu_custom_call.1} parent=1 // pred_fallthru
      _
    %68 = sfence
    %v69 = vld [vmem:[%s0] sm:$0x1]
    %s70 = scalar_lea.vmem %s0, 1
    %v71 = vld [vmem:[%s70] sm:$0x1]
    %s72 = scalar_lea.vmem %s0, 2
    %v73 = vld [vmem:[%s72] sm:$0x1]
    %s74 = scalar_lea.vmem %s0, 3
    %v75 = vld [vmem:[%s74] sm:$0x1]
    %s76 = sld [smem:[#allocation2]]
    %v77 = vstv %s76
    %v78 = vmul.f32 %v69, %v77
    %s79 = sld [smem:[#allocation2 + $0x80]]
    %v80 = vstv %s79
    %v81 = vmul.f32 %v71, %v80
    %v82 = vadd.f32 %v78, %v81
    %s83 = sld [smem:[#allocation2 + $0x100]]
    %v84 = vstv %s83
    %v85 = vmul.f32 %v73, %v84
    %v86 = vadd.f32 %v82, %v85
    %s87 = sld [smem:[#allocation2 + $0x180]]
    %v88 = vstv %s87
    %v89 = vmul.f32 %v75, %v88
    %v90 = vadd.f32 %v86, %v89
    %s91 = sld [smem:[#allocation5]]
    %v92 = vstv %s91
    %v93 = vadd.f32 %v90, %v92
    %v94 = vmul.f32 %v93, 0.5
    %v95 = vtanh.pop %v94
    %v96 = vadd.f32 %v95, 1.0
    %v97 = vmul.f32 %v96, 0.5
    %s98 = sld [smem:[#allocation2 + $0x1]]
    %v99 = vstv %s98
    %v100 = vmul.f32 %v69, %v99
    %s101 = sld [smem:[#allocation2 + $0x81]]
    %v102 = vstv %s101
    %v103 = vmul.f32 %v71, %v102
    %v104 = vadd.f32 %v100, %v103
    %s105 = sld [smem:[#allocation2 + $0x101]]
    %v106 = vstv %s105
    %v107 = vmul.f32 %v73, %v106
    %v108 = vadd.f32 %v104, %v107
    %s109 = sld [smem:[#allocation2 + $0x181]]
    %v110 = vstv %s109
    %v111 = vmul.f32 %v75, %v110
    %v112 = vadd.f32 %v108, %v111
    %s113 = sld [smem:[#allocation5 + $0x1]]
    %v114 = vstv %s113
    %v115 = vadd.f32 %v112, %v114
    %v116 = vmul.f32 %v115, 0.5
    %v117 = vtanh.pop %v116
    %v118 = vadd.f32 %v117, 1.0
    %v119 = vmul.f32 %v118, 0.5
    %s120 = sld [smem:[#allocation2 + $0x2]]
    %v121 = vstv %s120
    %v122 = vmul.f32 %v69, %v121
    %s123 = sld [smem:[#allocation2 + $0x82]]
    %v124 = vstv %s123
    %v125 = vmul.f32 %v71, %v124
    %v126 = vadd.f32 %v122, %v125
    %s127 = sld [smem:[#allocation2 + $0x102]]
    %v128 = vstv %s127
    %v129 = vmul.f32 %v73, %v128
    %v130 = vadd.f32 %v126, %v129
    %s131 = sld [smem:[#allocation2 + $0x182]]
    %v132 = vstv %s131
    %v133 = vmul.f32 %v75, %v132
    %v134 = vadd.f32 %v130, %v133
    %s135 = sld [smem:[#allocation5 + $0x2]]
    %v136 = vstv %s135
    %v137 = vadd.f32 %v134, %v136
    %v138 = vmul.f32 %v137, 0.5
    %v139 = vtanh.pop %v138
    %v140 = vadd.f32 %v139, 1.0
    %v141 = vmul.f32 %v140, 0.5
    %s142 = sld [smem:[#allocation2 + $0x3]]
    %v143 = vstv %s142
    %v144 = vmul.f32 %v69, %v143
    %s145 = sld [smem:[#allocation2 + $0x83]]
    %v146 = vstv %s145
    %v147 = vmul.f32 %v71, %v146
    %v148 = vadd.f32 %v144, %v147
    %s149 = sld [smem:[#allocation2 + $0x103]]
    %v150 = vstv %s149
    %v151 = vmul.f32 %v73, %v150
    %v152 = vadd.f32 %v148, %v151
    %s153 = sld [smem:[#allocation2 + $0x183]]
    %v154 = vstv %s153
    %v155 = vmul.f32 %v75, %v154
    %v156 = vadd.f32 %v152, %v155
    %s157 = sld [smem:[#allocation5 + $0x3]]
    %v158 = vstv %s157
    %v159 = vadd.f32 %v156, %v158
    %v160 = vmul.f32 %v159, 0.5
    %v161 = vtanh.pop %v160
    %v162 = vadd.f32 %v161, 1.0
    %v163 = vmul.f32 %v162, 0.5
    %s164 = sld [smem:[#allocation2 + $0x4]]
    %v165 = vstv %s164
    %v166 = vmul.f32 %v69, %v165
    %s167 = sld [smem:[#allocation2 + $0x84]]
    %v168 = vstv %s167
    %v169 = vmul.f32 %v71, %v168
    %v170 = vadd.f32 %v166, %v169
    %s171 = sld [smem:[#allocation2 + $0x104]]
    %v172 = vstv %s171
    %v173 = vmul.f32 %v73, %v172
    %v174 = vadd.f32 %v170, %v173
    %s175 = sld [smem:[#allocation2 + $0x184]]
    %v176 = vstv %s175
    %v177 = vmul.f32 %v75, %v176
    %v178 = vadd.f32 %v174, %v177
    %s179 = sld [smem:[#allocation5 + $0x4]]
    %v180 = vstv %s179
    %v181 = vadd.f32 %v178, %v180
    %v182 = vmul.f32 %v181, 0.5
    %v183 = vtanh.pop %v182
    %v184 = vadd.f32 %v183, 1.0
    %v185 = vmul.f32 %v184, 0.5
    %s186 = sld [smem:[#allocation2 + $0x5]]
    %v187 = vstv %s186
    %v188 = vmul.f32 %v69, %v187
    %s189 = sld [smem:[#allocation2 + $0x85]]
    %v190 = vstv %s189
    %v191 = vmul.f32 %v71, %v190
    %v192 = vadd.f32 %v188, %v191
    %s193 = sld [smem:[#allocation2 + $0x105]]
    %v194 = vstv %s193
    %v195 = vmul.f32 %v73, %v194
    %v196 = vadd.f32 %v192, %v195
    %s197 = sld [smem:[#allocation2 + $0x185]]
    %v198 = vstv %s197
    %v199 = vmul.f32 %v75, %v198
    %v200 = vadd.f32 %v196, %v199
    %s201 = sld [smem:[#allocation5 + $0x5]]
    %v202 = vstv %s201
    %v203 = vadd.f32 %v200, %v202
    %v204 = vmul.f32 %v203, 0.5
    %v205 = vtanh.pop %v204
    %v206 = vadd.f32 %v205, 1.0
    %v207 = vmul.f32 %v206, 0.5
    %s208 = sld [smem:[#allocation7]]
    %v209 = vstv %s208
    %v210 = vmul.f32 %v97, %v209
    %s211 = sld [smem:[#allocation7 + $0x80]]
    %v212 = vstv %s211
    %v213 = vmul.f32 %v119, %v212
    %v214 = vadd.f32 %v210, %v213
    %s215 = sld [smem:[#allocation7 + $0x100]]
    %v216 = vstv %s215
    %v217 = vmul.f32 %v141, %v216
    %v218 = vadd.f32 %v214, %v217
    %s219 = sld [smem:[#allocation7 + $0x180]]
    %v220 = vstv %s219
    %v221 = vmul.f32 %v163, %v220
    %v222 = vadd.f32 %v218, %v221
    %s223 = sld [smem:[#allocation7 + $0x200]]
    %v224 = vstv %s223
    %v225 = vmul.f32 %v185, %v224
    %v226 = vadd.f32 %v222, %v225
    %s227 = sld [smem:[#allocation7 + $0x280]]
    %v228 = vstv %s227
    %v229 = vmul.f32 %v207, %v228
    %v230 = vadd.f32 %v226, %v229
    %s231 = sld [smem:[#allocation8]]
    %v232 = vstv %s231
    %v233 = vadd.f32 %v230, %v232
    %s234 = sld [smem:[#allocation7 + $0x1]]
    %v235 = vstv %s234
    %v236 = vmul.f32 %v97, %v235
    %s237 = sld [smem:[#allocation7 + $0x81]]
    %v238 = vstv %s237
    %v239 = vmul.f32 %v119, %v238
    %v240 = vadd.f32 %v236, %v239
    %s241 = sld [smem:[#allocation7 + $0x101]]
    %v242 = vstv %s241
    %v243 = vmul.f32 %v141, %v242
    %v244 = vadd.f32 %v240, %v243
    %s245 = sld [smem:[#allocation7 + $0x181]]
    %v246 = vstv %s245
    %v247 = vmul.f32 %v163, %v246
    %v248 = vadd.f32 %v244, %v247
    %s249 = sld [smem:[#allocation7 + $0x201]]
    %v250 = vstv %s249
    %v251 = vmul.f32 %v185, %v250
    %v252 = vadd.f32 %v248, %v251
    %s253 = sld [smem:[#allocation7 + $0x281]]
    %v254 = vstv %s253
    %v255 = vmul.f32 %v207, %v254
    %v256 = vadd.f32 %v252, %v255
    %s257 = sld [smem:[#allocation8 + $0x1]]
    %v258 = vstv %s257
    %v259 = vadd.f32 %v256, %v258
    %s260 = sld [smem:[#allocation7 + $0x2]]
    %v261 = vstv %s260
    %v262 = vmul.f32 %v97, %v261
    %s263 = sld [smem:[#allocation7 + $0x82]]
    %v264 = vstv %s263
    %v265 = vmul.f32 %v119, %v264
    %v266 = vadd.f32 %v262, %v265
    %s267 = sld [smem:[#allocation7 + $0x102]]
    %v268 = vstv %s267
    %v269 = vmul.f32 %v141, %v268
    %v270 = vadd.f32 %v266, %v269
    %s271 = sld [smem:[#allocation7 + $0x182]]
    %v272 = vstv %s271
    %v273 = vmul.f32 %v163, %v272
    %v274 = vadd.f32 %v270, %v273
    %s275 = sld [smem:[#allocation7 + $0x202]]
    %v276 = vstv %s275
    %v277 = vmul.f32 %v185, %v276
    %v278 = vadd.f32 %v274, %v277
    %s279 = sld [smem:[#allocation7 + $0x282]]
    %v280 = vstv %s279
    %v281 = vmul.f32 %v207, %v280
    %v282 = vadd.f32 %v278, %v281
    %s283 = sld [smem:[#allocation8 + $0x2]]
    %v284 = vstv %s283
    %v285 = vadd.f32 %v282, %v284
    %v286 = vmax.f32 %v233, %v259
    %v287 = vmax.f32 %v286, %v285
    %v288 = vsub.f32 %v233, %v287
    %v289 = vmul.f32 %v288, 1.442695
    %v290 = vpow.pop %v289
    %v291 = vsub.f32 %v259, %v287
    %v292 = vmul.f32 %v291, 1.442695
    %v293 = vpow.pop %v292
    %v294 = vsub.f32 %v285, %v287
    %v295 = vmul.f32 %v294, 1.442695
    %v296 = vpow.pop %v295
    %v297 = vadd.f32 %v290, %v293
    %v298 = vadd.f32 %v297, %v296
    %v299 = vrcp.pop %v298
    %v300 = vmul.f32 1.0, %v299
    %v301 = vmul.f32 %v290, %v300
    %302 = vst [vmem:[#allocation10] sm:$0x1] %v301
    %v303 = vmul.f32 %v293, %v300
    %s304 = scalar_lea.vmem [#allocation10], 1
    %305 = vst [vmem:[%s304] sm:$0x1] %v303
    %v306 = vmul.f32 %v296, %v300
    %s307 = scalar_lea.vmem [#allocation10], 2
    %308 = vst [vmem:[%s307] sm:$0x1] %v306
    // Predicated region
    $region38: #{tpu_custom_call.1} parent=1 // pred_check
      _
    $region39: #{tpu_custom_call.1} parent=1 // pred_check_branch
      %310 = sbr.rel (0) target = $region41
    $region40: #{tpu_custom_call.1} parent=1 // pred_region
      %s312 = ssub.s32 48, 48
      %313 = vsyncadd [#allocation3], %s312
      %s314 = sshll.u32 [#allocation10], 4
      %s315 = int_to_ptr.vmem [resolvable:$true] %s314
      %320 = dma.vmem_to_hbm [thread:$0]  %s315, 48, %s5, [#allocation3], 16, 16, 1
    $region41: #{tpu_custom_call.1} parent=1 // pred_fallthru
      _
    // Predicated region
    $region42: #{tpu_custom_call.1} parent=1 // pred_check
      _
    $region43: #{tpu_custom_call.1} parent=1 // pred_check_branch
      %322 = sbr.rel (0) target = $region45
    $region44: #{tpu_custom_call.1} parent=1 // pred_region
      %323 = dma.done [#allocation3], 48
    $region45: #{tpu_custom_call.1} parent=1 // pred_fallthru
      _
    %324 = vsyncpa [#allocation3], 1
    %325 = vsyncpa [#allocation4], 1
    %326 = vsyncpa [#allocation6], 1
    %327 = vsyncpa [#allocation9], 1

</llo_original>
